<compile_context>
chip_gen: v6e
topology: v6e:2x2x1
jax: 0.10.0
libtpu: 0.0.40
codegen_flags: <defaults>
</compile_context>

<pallas_src>
import functools

import jax
import jax.numpy as jnp
from jax.experimental import pallas as pl
from jax.experimental.pallas import tpu as pltpu


def _round_up(x: int, m: int) -> int:
    return (x + m - 1) // m * m


def _time_emb_kernel(seed_ref, ids_ref, w_ref, alpha_ref, beta_ref, o_ref, *,
                     p, training, eps, tile, hidden, timesteps):
    # seed_ref : SMEM scalar-prefetch, int32[1]
    # ids_ref  : VMEM (TILE, 1) int32 token/timestep ids for this row tile
    # w_ref    : VMEM (T, H) embedding table (resident across the grid)
    # alpha_ref, beta_ref : VMEM (1, H) LayerNorm parameters (resident)
    # o_ref    : VMEM (TILE, H) output tile

    # ---- Embedding gather as a one-hot MXU matmul (exact row copy) ----
    ids = ids_ref[...]                                                  # (TILE, 1) int32
    iota_t = jax.lax.broadcasted_iota(jnp.int32, (tile, timesteps), 1)  # (TILE, T)
    onehot = (ids == iota_t).astype(w_ref.dtype)                        # (TILE, T)
    y = jnp.dot(onehot, w_ref[...], preferred_element_type=jnp.float32)  # (TILE, H) f32

    # ---- Inverted dropout (training only), integer-threshold compare ----
    if training and p > 0.0:
        base = pl.program_id(0) * tile
        row = jax.lax.broadcasted_iota(jnp.int32, (tile, hidden), 0) + base
        col = jax.lax.broadcasted_iota(jnp.int32, (tile, hidden), 1)
        idx = (row * hidden + col).astype(jnp.uint32)                   # global element index
        seed_u = seed_ref[0].astype(jnp.uint32) * jnp.uint32(0x9E3779B9)
        h = idx ^ seed_u
        # murmur3 fmix32
        h = h ^ (h >> jnp.uint32(16))
        h = h * jnp.uint32(0x85EBCA6B)
        h = h ^ (h >> jnp.uint32(13))
        h = h * jnp.uint32(0xC2B2AE35)
        h = h ^ (h >> jnp.uint32(16))
        thresh = jnp.uint32(min(int(round(p * (2.0 ** 32))), 2 ** 32 - 1))
        keep = h >= thresh                                              # P(drop) ~= p
        y = jnp.where(keep, y * (1.0 / (1.0 - p)), 0.0)

    # ---- LayerNorm (matches the custom PyTorch LayerNorm: unbiased std + eps) ----
    mean = jnp.mean(y, axis=-1, keepdims=True)
    off = y - mean
    var_unbiased = jnp.sum(off * off, axis=-1, keepdims=True) * (1.0 / (hidden - 1))
    sigma = jnp.sqrt(var_unbiased) + eps
    out = alpha_ref[...] * (off / sigma + beta_ref[...])
    o_ref[...] = out.astype(o_ref.dtype)


def time_embeddings(ids, table, alpha, beta, *, p: float = 0.1, training: bool = True,
                    seed: int = 0, eps: float = 1e-6, tile_rows: int = 512):
    """ids: [B, S] int32 timestep indices.  table: [T, H].  Returns [B, S, H]."""
    if training and not (0.0 <= p < 1.0):
        raise ValueError("dropout p must be in [0, 1) for training mode")

    B, S = ids.shape
    T, H = table.shape
    R = B * S

    # VMEM-aware row-tile size: double-buffered output + one-hot scratch per step,
    # leaves headroom for the resident table even on v7x's smaller VMEM.
    bytes_per_row = (2 * H + T) * 4
    cap = max(8, ((16 * 1024 * 1024) // bytes_per_row) // 8 * 8)
    tile = min(tile_rows, cap, _round_up(R, 8))
    tile = max(8, tile // 8 * 8)
    r_pad = _round_up(R, tile)
    n_tiles = r_pad // tile

    ids_flat = ids.reshape(R).astype(jnp.int32)
    ids_pad = jnp.pad(ids_flat, (0, r_pad - R)).reshape(r_pad, 1)
    alpha2 = alpha.reshape(1, H).astype(jnp.float32)
    beta2 = beta.reshape(1, H).astype(jnp.float32)
    seed_arr = jnp.array([seed], dtype=jnp.int32)

    kernel = functools.partial(
        _time_emb_kernel, p=float(p), training=bool(training), eps=float(eps),
        tile=tile, hidden=H, timesteps=T)

    out = pl.pallas_call(
        kernel,
        out_shape=jax.ShapeDtypeStruct((r_pad, H), table.dtype),
        grid_spec=pltpu.PrefetchScalarGridSpec(
            num_scalar_prefetch=1,
            grid=(n_tiles,),
            in_specs=[
                pl.BlockSpec((tile, 1), lambda i, seed: (i, 0)),   # ids (row tile)
                pl.BlockSpec((T, H), lambda i, seed: (0, 0)),      # embedding table (resident)
                pl.BlockSpec((1, H), lambda i, seed: (0, 0)),      # alpha (resident)
                pl.BlockSpec((1, H), lambda i, seed: (0, 0)),      # beta  (resident)
            ],
            out_specs=pl.BlockSpec((tile, H), lambda i, seed: (i, 0)),
        ),
        compiler_params=pltpu.CompilerParams(dimension_semantics=("parallel",)),
    )(seed_arr, ids_pad, table, alpha2, beta2)

    return out[:R].reshape(B, S, H)


if __name__ == "__main__":
    TIMESTEPS, HIDDEN = 128, 32     # vocab (number of timesteps), hidden_dim
    B, S = 2, 8                     # batch, seq_len
    P = 0.1
    EPS = 1e-6

    key = jax.random.PRNGKey(0)
    k1, k2, k3, k4 = jax.random.split(key, 4)
    table = jax.random.normal(k1, (TIMESTEPS, HIDDEN), dtype=jnp.float32)
    alpha = 1.0 + 0.05 * jax.random.normal(k2, (HIDDEN,), dtype=jnp.float32)
    beta = 0.05 * jax.random.normal(k3, (HIDDEN,), dtype=jnp.float32)
    ids = jax.random.randint(k4, (B, S), 0, TIMESTEPS, dtype=jnp.int32)

    # Eval mode (dropout = identity): check against a pure-JAX reference.
    y_eval = time_embeddings(ids, table, alpha, beta, p=P, training=False, eps=EPS)
    emb = table[ids]
    mean = emb.mean(axis=-1, keepdims=True)
    sigma = jnp.std(emb, axis=-1, ddof=1, keepdims=True) + EPS
    ref = alpha * ((emb - mean) / sigma + beta)
    assert y_eval.shape == (B, S, HIDDEN)
    assert jnp.allclose(y_eval, ref, atol=1e-5, rtol=1e-5), "eval-mode mismatch"

    # Training mode: in-kernel counter-based-hash dropout before the layer norm.
    y_train = time_embeddings(ids, table, alpha, beta, p=P, training=True, seed=1234, eps=EPS)
    jax.block_until_ready(y_train)
    assert bool(jnp.all(jnp.isfinite(y_train)))

    print("KERNEL_OK")
</pallas_src>

<mosaic_0001>
module attributes {stable_mosaic.version = 11 : i64} {
  func.func @_time_emb_kernel(%arg0: i32, %arg1: memref<1xi32, #tpu.memory_space<smem>>, %arg2: memref<16x1xi32, #tpu.memory_space<vmem>>, %arg3: memref<128x32xf32, #tpu.memory_space<vmem>>, %arg4: memref<1x32xf32, #tpu.memory_space<vmem>>, %arg5: memref<1x32xf32, #tpu.memory_space<vmem>>, %arg6: memref<16x32xf32, #tpu.memory_space<vmem>>) attributes {dimension_semantics = [#tpu.dimension_semantics<parallel>], iteration_bounds = array<i64: 1>, scalar_prefetch = 1 : i64, scratch_operands = 0 : i64, tpu.core_type = #tpu.core_type<tc>, window_params = [{transform_indices = @transform_0, window_bounds = array<i64: 16, 1>}, {pipeline_mode = #tpu.pipeline_mode<synchronous>, transform_indices = @transform_1, window_bounds = array<i64: 128, 32>}, {pipeline_mode = #tpu.pipeline_mode<synchronous>, transform_indices = @transform_2, window_bounds = array<i64: 1, 32>}, {pipeline_mode = #tpu.pipeline_mode<synchronous>, transform_indices = @transform_3, window_bounds = array<i64: 1, 32>}, {transform_indices = @transform_4, window_bounds = array<i64: 16, 32>}]} {
    %c0 = arith.constant 0 : index
    %c0_0 = arith.constant 0 : index
    %0 = vector.load %arg2[%c0, %c0_0] : memref<16x1xi32, #tpu.memory_space<vmem>>, vector<16x1xi32>
    %1 = tpu.iota {dimensions = array<i32: 1>} : vector<16x128xi32>
    %2 = vector.broadcast %0 : vector<16x1xi32> to vector<16x128xi32>
    %3 = arith.cmpi eq, %2, %1 : vector<16x128xi32>
    %4 = arith.extui %3 : vector<16x128xi1> to vector<16x128xi32>
    %5 = arith.sitofp %4 : vector<16x128xi32> to vector<16x128xf32>
    %c0_1 = arith.constant 0 : index
    %c0_2 = arith.constant 0 : index
    %6 = vector.load %arg3[%c0_1, %c0_2] : memref<128x32xf32, #tpu.memory_space<vmem>>, vector<128x32xf32>
    %cst = arith.constant dense<0.000000e+00> : vector<16x32xf32>
    %7 = tpu.matmul %5, %6, %cst {dimension_numbers = #tpu.dot_dimension_numbers<[1], [0], [0], [1], [0, 0, 1, 1], [], []>} : vector<16x128xf32>, vector<128x32xf32>, vector<16x32xf32> -> vector<16x32xf32>
    %cst_3 = arith.constant dense<0.000000e+00> : vector<16xf32>
    %8 = vector.multi_reduction <add>, %7, %cst_3 [1] : vector<16x32xf32> to vector<16xf32>
    %9 = vector.shape_cast %8 : vector<16xf32> to vector<16x1xf32>
    %cst_4 = arith.constant 3.200000e+01 : f32
    %10 = vector.broadcast %cst_4 : f32 to vector<16x1xf32>
    %11 = arith.divf %9, %10 : vector<16x1xf32>
    %12 = vector.broadcast %11 : vector<16x1xf32> to vector<16x32xf32>
    %13 = arith.subf %7, %12 : vector<16x32xf32>
    %14 = arith.mulf %13, %13 : vector<16x32xf32>
    %cst_5 = arith.constant dense<0.000000e+00> : vector<16xf32>
    %15 = vector.multi_reduction <add>, %14, %cst_5 [1] : vector<16x32xf32> to vector<16xf32>
    %16 = vector.shape_cast %15 : vector<16xf32> to vector<16x1xf32>
    %cst_6 = arith.constant 0.0322580636 : f32
    %17 = vector.broadcast %cst_6 : f32 to vector<16x1xf32>
    %18 = arith.mulf %16, %17 : vector<16x1xf32>
    %19 = math.sqrt %18 : vector<16x1xf32>
    %cst_7 = arith.constant 9.99999997E-7 : f32
    %20 = vector.broadcast %cst_7 : f32 to vector<16x1xf32>
    %21 = arith.addf %19, %20 : vector<16x1xf32>
    %c0_8 = arith.constant 0 : index
    %c0_9 = arith.constant 0 : index
    %22 = vector.load %arg4[%c0_8, %c0_9] : memref<1x32xf32, #tpu.memory_space<vmem>>, vector<1x32xf32>
    %23 = vector.broadcast %21 : vector<16x1xf32> to vector<16x32xf32>
    %24 = arith.divf %13, %23 : vector<16x32xf32>
    %c0_10 = arith.constant 0 : index
    %c0_11 = arith.constant 0 : index
    %25 = vector.load %arg5[%c0_10, %c0_11] : memref<1x32xf32, #tpu.memory_space<vmem>>, vector<1x32xf32>
    %26 = vector.broadcast %25 : vector<1x32xf32> to vector<16x32xf32>
    %27 = arith.addf %24, %26 : vector<16x32xf32>
    %28 = vector.broadcast %22 : vector<1x32xf32> to vector<16x32xf32>
    %29 = arith.mulf %28, %27 : vector<16x32xf32>
    %c0_12 = arith.constant 0 : index
    %c0_13 = arith.constant 0 : index
    %30 = vector.load %arg6[%c0_12, %c0_13] : memref<16x32xf32, #tpu.memory_space<vmem>>, vector<16x32xf32>
    tpu.vector_store %arg6[%c0_12, %c0_13], %29 {strides = array<i32>} : memref<16x32xf32, #tpu.memory_space<vmem>>, vector<16x32xf32>,
    return
  }
  func.func @transform_0(%arg0: i32, %arg1: memref<1xi32, #tpu.memory_space<smem>>) -> (i32, i32) {
    %c0_i32 = arith.constant 0 : i32
    %c0_i32_0 = arith.constant 0 : i32
    return %arg0, %c0_i32 : i32, i32
  }
  func.func @transform_1(%arg0: i32, %arg1: memref<1xi32, #tpu.memory_space<smem>>) -> (i32, i32) {
    %c0_i32 = arith.constant 0 : i32
    %c0_i32_0 = arith.constant 0 : i32
    %c0_i32_1 = arith.constant 0 : i32
    return %c0_i32, %c0_i32_0 : i32, i32
  }
  func.func @transform_2(%arg0: i32, %arg1: memref<1xi32, #tpu.memory_space<smem>>) -> (i32, i32) {
    %c0_i32 = arith.constant 0 : i32
    %c0_i32_0 = arith.constant 0 : i32
    %c0_i32_1 = arith.constant 0 : i32
    return %c0_i32, %c0_i32_0 : i32, i32
  }
  func.func @transform_3(%arg0: i32, %arg1: memref<1xi32, #tpu.memory_space<smem>>) -> (i32, i32) {
    %c0_i32 = arith.constant 0 : i32
    %c0_i32_0 = arith.constant 0 : i32
    %c0_i32_1 = arith.constant 0 : i32
    return %c0_i32, %c0_i32_0 : i32, i32
  }
  func.func @transform_4(%arg0: i32, %arg1: memref<1xi32, #tpu.memory_space<smem>>) -> (i32, i32) {
    %c0_i32 = arith.constant 0 : i32
    %c0_i32_0 = arith.constant 0 : i32
    return %arg0, %c0_i32 : i32, i32
  }
}

</mosaic_0001>

<llo_original>
// kernel: tpu_custom_call.1
$region0: #{tpu_custom_call.1}
  #allocation0 [shape = 'u32[]', space=smem, size = 0x4, offset = 0x4, fixed_abs, tag = 'smem constant byte address 0x4 - core index']
  #allocation1 [shape = 'u32[144,128]{1,0:T(1,128)}', space=vmem, size = 0x12000, scoped, tag = 'internal scratch']
  #allocation2 [shape = 's32[1]{0}', space=sflag, size = 0x4, scoped, tag = 'scoped memory for tpu_custom_call.1']
  #allocation3 [shape = 's32[1]{0:T(128)S(6)}', space=smem, size = 0x200, scoped, tag = 'prefetched SMEM operand 0']
  %s0 = inlined_call_operand.<no memory space> [shape: s32[1], index: 0, kind: input, shape index: {}]
  %s1 = inlined_call_operand.vmem [shape: s32[16,1], index: 1, kind: input, shape index: {}]
  %s2 = inlined_call_operand.vmem [shape: f32[128,32], index: 2, kind: input, shape index: {}]
  %s3 = inlined_call_operand.vmem [shape: f32[1,32], index: 3, kind: input, shape index: {}]
  %s4 = inlined_call_operand.vmem [shape: f32[1,32], index: 4, kind: input, shape index: {}]
  %s5 = inlined_call_operand.hbm [shape: f32[16,32], index: 5, kind: output, shape index: {}]
  %s6 = sld [smem:[#allocation0]]
  $region26: #{tpu_custom_call.1} parent=0
    _
  %s8 = ssub.s32 1, %s6
  %s9 = scalar_select 0, %s8, %s6
  %10 = sst [smem:[#allocation3]] %s0
  $region1: #{tpu_custom_call.1} parent=0
    #allocation4 [shape = 'u8[8192]{0}', space=vmem, size = 0x2000, scoped, tag = 'output window, operand 0, single buffered']
    #allocation5 [shape = 's32[1]{0}', space=sflag, size = 0x4, scoped, tag = 'scoped memory for tpu_custom_call.1']
    %11 = vsyncpa [#allocation5], 0
    // Predicated region
    $region2: #{tpu_custom_call.1} parent=1 // pred_check
      _
    $region3: #{tpu_custom_call.1} parent=1 // pred_check_branch
      %13 = sbr.rel (0) target = $region5
    $region4: #{tpu_custom_call.1} parent=1 // pred_region
      _
    $region5: #{tpu_custom_call.1} parent=1 // pred_fallthru
      _
    // Predicated region
    $region6: #{tpu_custom_call.1} parent=1 // pred_check
      _
    $region7: #{tpu_custom_call.1} parent=1 // pred_check_branch
      %15 = sbr.rel (0) target = $region9
    $region8: #{tpu_custom_call.1} parent=1 // pred_region
      _
    $region9: #{tpu_custom_call.1} parent=1 // pred_fallthru
      _
    // Predicated region
    $region10: #{tpu_custom_call.1} parent=1 // pred_check
      _
    $region11: #{tpu_custom_call.1} parent=1 // pred_check_branch
      %17 = sbr.rel (0) target = $region13
    $region12: #{tpu_custom_call.1} parent=1 // pred_region
      _
    $region13: #{tpu_custom_call.1} parent=1 // pred_fallthru
      _
    // Predicated region
    $region14: #{tpu_custom_call.1} parent=1 // pred_check
      _
    $region15: #{tpu_custom_call.1} parent=1 // pred_check_branch
      %19 = sbr.rel (0) target = $region17
    $region16: #{tpu_custom_call.1} parent=1 // pred_region
      _
    $region17: #{tpu_custom_call.1} parent=1 // pred_fallthru
      _
    %v20 = vld [vmem:[%s1] sm:$0xff]
    %v21 = vld [vmem:[%s1 + $0x8] sm:$0xff]
    %v22 = vlaneseq
    %v23 = vand.u32 %v22, 127
    %24 = vset.pattern.permute.xlu0 0
    %25 = vperm.xlu0 %24, %v20
    %v26 = vpop.permute.xlu0 %25
    %27 = vset.pattern.permute.xlu0 0
    %28 = vperm.xlu0 %27, %v21
    %v29 = vpop.permute.xlu0 %28
    %vm30 = vcmp.eq.s32.totalorder %v26, %v23
    %vm31 = vcmp.eq.s32.totalorder %v29, %v23
    %v32 = vsel %vm30, 1, 0
    %v33 = vsel %vm31, 1, 0
    %v34 = vcvt.s32.f32 %v32
    %v35 = vcvt.s32.f32 %v33
    %v36 = vld [vmem:[%s2] sm:$0xff]
    %v37 = vld [vmem:[%s2 + $0x8] sm:$0xff]
    %v38 = vld [vmem:[%s2 + $0x10] sm:$0xff]
    %v39 = vld [vmem:[%s2 + $0x18] sm:$0xff]
    %v40 = vld [vmem:[%s2 + $0x20] sm:$0xff]
    %v41 = vld [vmem:[%s2 + $0x28] sm:$0xff]
    %v42 = vld [vmem:[%s2 + $0x30] sm:$0xff]
    %v43 = vld [vmem:[%s2 + $0x38] sm:$0xff]
    %v44 = vld [vmem:[%s2 + $0x40] sm:$0xff]
    %v45 = vld [vmem:[%s2 + $0x48] sm:$0xff]
    %v46 = vld [vmem:[%s2 + $0x50] sm:$0xff]
    %v47 = vld [vmem:[%s2 + $0x58] sm:$0xff]
    %v48 = vld [vmem:[%s2 + $0x60] sm:$0xff]
    %v49 = vld [vmem:[%s2 + $0x68] sm:$0xff]
    %v50 = vld [vmem:[%s2 + $0x70] sm:$0xff]
    %v51 = vld [vmem:[%s2 + $0x78] sm:$0xff]
    %52 = vmatprep.subr.mxu0 0.0
    %53 = vmatpush1.msra.mxu0 %v51
    %54 = vmatprep.subr.mxu0 0.0
    %55 = vmatpush1.msra.mxu0 %v50
    %56 = vmatprep.subr.mxu0 0.0
    %57 = vmatpush1.msra.mxu0 %v49
    %58 = vmatprep.subr.mxu0 0.0
    %59 = vmatpush1.msra.mxu0 %v48
    %60 = vmatprep.subr.mxu0 0.0
    %61 = vmatpush1.msra.mxu0 %v47
    %62 = vmatprep.subr.mxu0 0.0
    %63 = vmatpush1.msra.mxu0 %v46
    %64 = vmatprep.subr.mxu0 0.0
    %65 = vmatpush1.msra.mxu0 %v45
    %66 = vmatprep.subr.mxu0 0.0
    %67 = vmatpush1.msra.mxu0 %v44
    %68 = vmatprep.subr.mxu0 0.0
    %69 = vmatpush1.msra.mxu0 %v43
    %70 = vmatprep.subr.mxu0 0.0
    %71 = vmatpush1.msra.mxu0 %v42
    %72 = vmatprep.subr.mxu0 0.0
    %73 = vmatpush1.msra.mxu0 %v41
    %74 = vmatprep.subr.mxu0 0.0
    %75 = vmatpush1.msra.mxu0 %v40
    %76 = vmatprep.subr.mxu0 0.0
    %77 = vmatpush1.msra.mxu0 %v39
    %78 = vmatprep.subr.mxu0 0.0
    %79 = vmatpush1.msra.mxu0 %v38
    %80 = vmatprep.subr.mxu0 0.0
    %81 = vmatpush1.msra.mxu0 %v37
    %82 = vmatprep.subr.mxu0 0.0
    %83 = vmatpush1.msra.mxu0 %v36
    %84 = vmatprep.subr.mxu0 0.0
    %85 = vmatpush2.msra.mxu0 0.0
    %86 = vmatprep.subr.mxu0 0.0
    %87 = vmatpush2.msra.mxu0 0.0
    %88 = vmatprep.subr.mxu0 0.0
    %89 = vmatpush2.msra.mxu0 0.0
    %90 = vmatprep.subr.mxu0 0.0
    %91 = vmatpush2.msra.mxu0 0.0
    %92 = vmatprep.subr.mxu0 0.0
    %93 = vmatpush2.msra.mxu0 0.0
    %94 = vmatprep.subr.mxu0 0.0
    %95 = vmatpush2.msra.mxu0 0.0
    %96 = vmatprep.subr.mxu0 0.0
    %97 = vmatpush2.msra.mxu0 0.0
    %98 = vmatprep.subr.mxu0 0.0
    %99 = vmatpush2.msra.mxu0 0.0
    %100 = vmatprep.subr.mxu0 0.0
    %101 = vmatpush2.msra.mxu0 0.0
    %102 = vmatprep.subr.mxu0 0.0
    %103 = vmatpush2.msra.mxu0 0.0
    %104 = vmatprep.subr.mxu0 0.0
    %105 = vmatpush2.msra.mxu0 0.0
    %106 = vmatprep.subr.mxu0 0.0
    %107 = vmatpush2.msra.mxu0 0.0
    %108 = vmatprep.subr.mxu0 0.0
    %109 = vmatpush2.msra.mxu0 0.0
    %110 = vmatprep.subr.mxu0 0.0
    %111 = vmatpush2.msra.mxu0 0.0
    %112 = vmatprep.subr.mxu0 0.0
    %113 = vmatpush2.msra.mxu0 0.0
    %114 = vmatprep.subr.mxu0 0.0
    %115 = vmatpush2.msra.mxu0 0.0
    %116 = vmatprep.mubr.f32.mxu0 0.0
    %117 = vmatmul.mubr.f32.gmra.mxu0 %v34
    %v118 = vpop.f32.mrf.mxu0
    %v119 = vadd.f32 0.0, %v118
    %v120 = vpop.f32.mrf.mxu0
    %121 = vmatprep.mubr.f32.mxu0 0.0
    %122 = vmatmul.mubr.f32.gmra.mxu0 %v35
    %v123 = vpop.f32.mrf.mxu0
    %v124 = vadd.f32 0.0, %v123
    %v125 = vpop.f32.mrf.mxu0
    %126 = vdwg.mxu0
    %vm127 = vcmask 261120
    %v128 = vsel %vm127, %v119, 0.0
    %129 = vadd.xlane.f32.xlu0 %v128
    %v130 = vpop.xlane.xlu0 %129
    %v131 = vsel %vm127, %v124, 0.0
    %132 = vadd.xlane.f32.xlu0 %v131
    %v133 = vpop.xlane.xlu0 %132
    %v134 = vrcp.pop 32.0
    %v135 = vmul.f32 %v130, %v134
    %v136 = vmul.f32 %v133, %v134
    %v137 = vsub.f32 %v119, %v135
    %v138 = vsub.f32 %v124, %v136
    %v139 = vmul.f32 %v137, %v137
    %v140 = vmul.f32 %v138, %v138
    %v141 = vsel %vm127, %v139, 0.0
    %142 = vadd.xlane.f32.xlu0 %v141
    %v143 = vpop.xlane.xlu0 %142
    %v144 = vsel %vm127, %v140, 0.0
    %145 = vadd.xlane.f32.xlu0 %v144
    %v146 = vpop.xlane.xlu0 %145
    %v147 = vmul.f32 %v143, 0.032258064
    %v148 = vmul.f32 %v146, 0.032258064
    %v149 = vrsqrt.pop %v147
    %v150 = vmul.f32 %v147, %v149
    %vm151 = vcmp.eq.f32.partialorder %v147, inf
    %v152 = vsel %vm151, %v147, %v150
    %vm153 = vcmp.eq.f32.partialorder %v147, 0.0
    %v154 = vand.u32 %v147, 2147483648
    %v155 = vsel %vm153, %v154, %v152
    %v156 = vrsqrt.pop %v148
    %v157 = vmul.f32 %v148, %v156
    %vm158 = vcmp.eq.f32.partialorder %v148, inf
    %v159 = vsel %vm158, %v148, %v157
    %vm160 = vcmp.eq.f32.partialorder %v148, 0.0
    %v161 = vand.u32 %v148, 2147483648
    %v162 = vsel %vm160, %v161, %v159
    %v163 = vadd.f32 %v155, 1e-06
    %v164 = vadd.f32 %v162, 1e-06
    %v165 = vld [vmem:[%s3] sm:$0x1]
    %v166 = vrcp.pop %v163
    %v167 = vmul.f32 %v137, %v166
    %v168 = vrcp.pop %v164
    %v169 = vmul.f32 %v138, %v168
    %v170 = vld [vmem:[%s4] sm:$0x1]
    %v172 = vlaneseq
    %v173 = vshrl.u32 %v172, 7
    %v174 = vsub.s32 0, %v173
    %v175 = vrot.slane %v170, %v174
    %v177 = vadd.f32 %v167, %v175
    %v178 = vadd.f32 %v169, %v175
    %v180 = vlaneseq
    %v181 = vshrl.u32 %v180, 7
    %v182 = vsub.s32 0, %v181
    %v183 = vrot.slane %v165, %v182
    %v185 = vmul.f32 %v183, %v177
    %v186 = vmul.f32 %v183, %v178
    %187 = vst.msk [vmem:[#allocation4] sm:$0xff] %vm127, %v185
    %188 = vst.msk [vmem:[#allocation4 + $0x8] sm:$0xff] %vm127, %v186
    // Predicated region
    $region18: #{tpu_custom_call.1} parent=1 // pred_check
      _
    $region19: #{tpu_custom_call.1} parent=1 // pred_check_branch
      %190 = sbr.rel (0) target = $region21
    $region20: #{tpu_custom_call.1} parent=1 // pred_region
      %s192 = ssub.s32 256, 256
      %193 = vsyncadd [#allocation5], %s192
      %s194 = sshll.u32 [#allocation4], 4
      %s195 = int_to_ptr.vmem [resolvable:$true] %s194
      %200 = dma.vmem_to_hbm [thread:$0]  %s195, 256, %s5, [#allocation5], 128, 128, 8
    $region21: #{tpu_custom_call.1} parent=1 // pred_fallthru
      _
    // Predicated region
    $region22: #{tpu_custom_call.1} parent=1 // pred_check
      _
    $region23: #{tpu_custom_call.1} parent=1 // pred_check_branch
      %202 = sbr.rel (0) target = $region25
    $region24: #{tpu_custom_call.1} parent=1 // pred_region
      %203 = dma.done [#allocation5], 256
    $region25: #{tpu_custom_call.1} parent=1 // pred_fallthru
      _
    %204 = vsyncpa [#allocation5], 1

</llo_original>
